<compile_context>
chip_gen: v7x
topology: tpu7x:2x2x1
jax: 0.10.0
libtpu: 0.0.40
codegen_flags: <defaults>
</compile_context>

<pallas_src>
import jax
import jax.numpy as jnp
from jax.experimental import pallas as pl
from jax.experimental.pallas import tpu as pltpu

_MIB = 1024 * 1024


# ----------------------------------------------------------------------------
# Kernel
# ----------------------------------------------------------------------------
def _sae_fused_kernel(x_ref, w_enc_ref, b_enc_ref, w_dec_ref, b_dec_ref,
                      recon_ref, acts_ref, acc_ref):
    j = pl.program_id(1)

    @pl.when(j == 0)
    def _():
        acc_ref[...] = jnp.zeros_like(acc_ref)

    # encode on this d_sae tile: ReLU(x @ W_enc_tile + b_enc'_tile)
    # (b_dec was folded into b_enc' in the wrapper: b_enc' = b_enc - b_dec@W_enc)
    pre = jnp.dot(x_ref[...], w_enc_ref[...],
                  preferred_element_type=jnp.float32) + b_enc_ref[...]
    acts_f32 = jnp.maximum(pre, 0.0)                 # f32 epilogue on the VPU
    acts_out = acts_f32.astype(acts_ref.dtype)
    acts_ref[...] = acts_out

    # decode partial sum for this d_sae tile, accumulated in f32 VMEM scratch.
    # Decode from the *stored* (cast) activations so recon is consistent with
    # the returned feature_acts.
    acc_ref[...] += jnp.dot(acts_out.astype(w_dec_ref.dtype), w_dec_ref[...],
                            preferred_element_type=jnp.float32)

    @pl.when(j == pl.num_programs(1) - 1)
    def _():
        recon_ref[...] = (acc_ref[...] + b_dec_ref[...]).astype(recon_ref.dtype)


# ----------------------------------------------------------------------------
# Tile selection helpers
# ----------------------------------------------------------------------------
def _pick_tile(dim, target, align):
    """Largest multiple of `align` dividing `dim` and <= target; falls back to
    the full dim (block == full array is always legal)."""
    if dim <= target:
        return dim
    t = (target // align) * align
    while t >= align:
        if dim % t == 0:
            return t
        t -= align
    return dim


def _vmem_estimate(t_n, t_sae, d_in, in_isz, out_isz):
    """Rough VMEM footprint: double-buffered pipeline buffers + f32 scratch."""
    w_enc_t = d_in * t_sae * in_isz
    w_dec_t = t_sae * d_in * in_isz
    x_t = t_n * d_in * in_isz
    acts_t = t_n * t_sae * out_isz
    recon_t = t_n * d_in * out_isz
    bias_t = (t_sae + d_in) * 4
    scratch = t_n * d_in * 4
    return 2 * (w_enc_t + w_dec_t + x_t + acts_t + recon_t + bias_t) + scratch


# ----------------------------------------------------------------------------
# Wrapper
# ----------------------------------------------------------------------------
def sae_forward(x, w_enc, b_enc, w_dec, b_dec, *, compute_dtype=None,
                block_n=None, block_sae=None):
    """x: [batch, seq, d_in] (or [N, d_in]). Returns (recon, feature_acts)."""
    orig_shape = x.shape
    d_in = x.shape[-1]
    d_sae = w_enc.shape[1]
    out_dtype = x.dtype

    if compute_dtype is not None:
        x = x.astype(compute_dtype)
        w_enc = w_enc.astype(compute_dtype)
        w_dec = w_dec.astype(compute_dtype)

    x2d = x.reshape(-1, d_in)
    n = x2d.shape[0]

    # Fold the decoder bias into the encoder bias (in f32):
    #   (x - b_dec) @ W_enc + b_enc == x @ W_enc + (b_enc - b_dec @ W_enc)
    b_dec_f32 = b_dec.astype(jnp.float32)
    b_enc_fold = (b_enc.astype(jnp.float32)
                  - b_dec_f32 @ w_enc.astype(jnp.float32)).reshape(1, d_sae)
    b_dec2d = b_dec_f32.reshape(1, d_in)

    in_isz = jnp.dtype(x.dtype).itemsize
    out_isz = jnp.dtype(out_dtype).itemsize

    # VMEM budget from the actual chip (v7x 64 MiB vs v5e/v6e 128 MiB).
    try:
        vmem_cap = int(pltpu.get_tpu_info().vmem_capacity_bytes)
    except Exception:
        vmem_cap = 64 * _MIB          # conservative (v7x) if query unavailable
    budget = int(vmem_cap * 0.6)

    # Tile sizes: big N tiles amortize weight streaming; d_sae tiles sized to
    # keep double-buffered weight tiles inside the VMEM budget.
    t_n = block_n if block_n is not None else _pick_tile(n, 512, 8)
    if block_sae is not None:
        t_sae = block_sae
    else:
        t_sae = _pick_tile(d_sae, 128, 128)
        for target in (8192, 4096, 2048, 1024, 512, 256, 128):
            cand = _pick_tile(d_sae, target, 128)
            if _vmem_estimate(t_n, cand, d_in, in_isz, out_isz) <= budget:
                t_sae = cand
                break
    while (_vmem_estimate(t_n, t_sae, d_in, in_isz, out_isz) > budget
           and t_n % 16 == 0):
        t_n //= 2

    assert n % t_n == 0 and d_sae % t_sae == 0, (n, t_n, d_sae, t_sae)
    grid = (n // t_n, d_sae // t_sae)

    est = _vmem_estimate(t_n, t_sae, d_in, in_isz, out_isz)
    vmem_limit = int(min(vmem_cap, max(32 * _MIB, 2 * est)))

    flops = 4 * n * d_in * d_sae          # two matmuls: 2*N*d_in*d_sae each
    bytes_accessed = int(
        x2d.size * in_isz
        + grid[0] * (w_enc.size + w_dec.size) * in_isz   # weights re-streamed per N tile
        + (b_enc_fold.size + b_dec2d.size) * 4
        + n * d_sae * out_isz + n * d_in * out_isz)

    recon, acts = pl.pallas_call(
        _sae_fused_kernel,
        out_shape=(
            jax.ShapeDtypeStruct((n, d_in), out_dtype),    # recon
            jax.ShapeDtypeStruct((n, d_sae), out_dtype),   # feature_acts
        ),
        grid_spec=pltpu.PrefetchScalarGridSpec(
            num_scalar_prefetch=0,
            grid=grid,
            in_specs=[
                pl.BlockSpec((t_n, d_in), lambda i, j: (i, 0)),     # x
                pl.BlockSpec((d_in, t_sae), lambda i, j: (0, j)),   # W_enc
                pl.BlockSpec((1, t_sae), lambda i, j: (0, j)),      # b_enc'
                pl.BlockSpec((t_sae, d_in), lambda i, j: (j, 0)),   # W_dec
                pl.BlockSpec((1, d_in), lambda i, j: (0, 0)),       # b_dec
            ],
            out_specs=(
                pl.BlockSpec((t_n, d_in), lambda i, j: (i, 0)),     # recon (acc)
                pl.BlockSpec((t_n, t_sae), lambda i, j: (i, j)),    # acts
            ),
            scratch_shapes=[pltpu.VMEM((t_n, d_in), jnp.float32)],
        ),
        compiler_params=pltpu.CompilerParams(
            dimension_semantics=("parallel", "arbitrary"),
            vmem_limit_bytes=vmem_limit,
        ),
        cost_estimate=pl.CostEstimate(flops=flops, transcendentals=0,
                                      bytes_accessed=bytes_accessed),
    )(x2d, w_enc, b_enc_fold, w_dec, b_dec2d)

    recon = recon.reshape(orig_shape)
    acts = acts.reshape(orig_shape[:-1] + (d_sae,))
    return recon, acts


# ----------------------------------------------------------------------------
# Deterministic synthetic parameters (BaseSAE zero-inits; we use small random
# values so the kernel exercises real compute; W_dec rows unit-normalized per
# check_decoder_norms semantics).
# ----------------------------------------------------------------------------
def init_params(key, d_in, d_sae, dtype=jnp.float32):
    k1, k2, k3, k4 = jax.random.split(key, 4)
    w_enc = jax.random.normal(k1, (d_in, d_sae), dtype) * 0.05
    w_dec = jax.random.normal(k2, (d_sae, d_in), jnp.float32)
    w_dec = (w_dec / jnp.linalg.norm(w_dec, axis=1, keepdims=True)).astype(dtype)
    b_enc = jax.random.normal(k3, (d_sae,), dtype) * 0.01
    b_dec = jax.random.normal(k4, (d_in,), dtype) * 0.01
    return w_enc, b_enc, w_dec, b_dec


if __name__ == "__main__":
    batch, seq, d_in, d_sae = 2, 8, 128, 256
    key = jax.random.PRNGKey(0)
    kx, kp = jax.random.split(key)
    x = jax.random.normal(kx, (batch, seq, d_in), jnp.float32)
    w_enc, b_enc, w_dec, b_dec = init_params(kp, d_in, d_sae)

    # Force a non-trivial (2, 2) grid at toy sizes to exercise the tiled,
    # fused encode->decode accumulation path.
    recon, acts = sae_forward(x, w_enc, b_enc, w_dec, b_dec,
                              block_n=8, block_sae=128)
    jax.block_until_ready((recon, acts))

    # plain-JAX reference (full-precision matmuls)
    hp = jax.lax.Precision.HIGHEST
    pre_ref = jnp.einsum('bsd,df->bsf', x - b_dec, w_enc, precision=hp) + b_enc
    acts_ref = jnp.maximum(pre_ref, 0.0)
    recon_ref = jnp.einsum('bsf,fd->bsd', acts_ref, w_dec, precision=hp) + b_dec
    assert jnp.allclose(acts, acts_ref, atol=1e-3, rtol=1e-3)
    assert jnp.allclose(recon, recon_ref, atol=1e-3, rtol=1e-3)

    # bf16 MXU path (what real SAE sizes would use) — loose tolerance.
    recon_bf, acts_bf = sae_forward(x, w_enc, b_enc, w_dec, b_dec,
                                    compute_dtype=jnp.bfloat16,
                                    block_n=8, block_sae=128)
    jax.block_until_ready((recon_bf, acts_bf))
    assert jnp.allclose(acts_bf, acts_ref, atol=1e-1, rtol=1e-1)
    assert jnp.allclose(recon_bf, recon_ref, atol=1e-1, rtol=1e-1)

    print("KERNEL_OK")
</pallas_src>

<mosaic_0001>
module attributes {stable_mosaic.version = 11 : i64} {
  func.func @_sae_fused_kernel(%arg0: i32, %arg1: i32, %arg2: memref<8x128xf32, #tpu.memory_space<vmem>>, %arg3: memref<128x128xf32, #tpu.memory_space<vmem>>, %arg4: memref<1x128xf32, #tpu.memory_space<vmem>>, %arg5: memref<128x128xf32, #tpu.memory_space<vmem>>, %arg6: memref<1x128xf32, #tpu.memory_space<vmem>>, %arg7: memref<8x128xf32, #tpu.memory_space<vmem>>, %arg8: memref<8x128xf32, #tpu.memory_space<vmem>>, %arg9: memref<8x128xf32, #tpu.memory_space<vmem>>) attributes {dimension_semantics = [#tpu.dimension_semantics<parallel>, #tpu.dimension_semantics<arbitrary>], iteration_bounds = array<i64: 2, 2>, scalar_prefetch = 0 : i64, scratch_operands = 1 : i64, tpu.core_type = #tpu.core_type<tc>, window_params = [{transform_indices = @transform_0, window_bounds = array<i64: 8, 128>}, {transform_indices = @transform_1, window_bounds = array<i64: 128, 128>}, {transform_indices = @transform_2, window_bounds = array<i64: 1, 128>}, {transform_indices = @transform_3, window_bounds = array<i64: 128, 128>}, {pipeline_mode = #tpu.pipeline_mode<synchronous>, transform_indices = @transform_4, window_bounds = array<i64: 1, 128>}, {transform_indices = @transform_5, window_bounds = array<i64: 8, 128>}, {transform_indices = @transform_6, window_bounds = array<i64: 8, 128>}]} {
    %c0_i32 = arith.constant 0 : i32
    %0 = arith.cmpi eq, %arg1, %c0_i32 : i32
    %1 = arith.extui %0 : i1 to i32
    %c0_i32_0 = arith.constant 0 : i32
    %2 = arith.cmpi ne, %1, %c0_i32_0 : i32
    scf.if %2 {
      %cst_17 = arith.constant 0.000000e+00 : f32
      %20 = vector.broadcast %cst_17 : f32 to vector<8x128xf32>
      %c0_18 = arith.constant 0 : index
      %c0_19 = arith.constant 0 : index
      %21 = vector.load %arg9[%c0_18, %c0_19] : memref<8x128xf32, #tpu.memory_space<vmem>>, vector<8x128xf32>
      tpu.vector_store %arg9[%c0_18, %c0_19], %20 {strides = array<i32>} : memref<8x128xf32, #tpu.memory_space<vmem>>, vector<8x128xf32>,
    } else {
    }
    %c0 = arith.constant 0 : index
    %c0_1 = arith.constant 0 : index
    %3 = vector.load %arg2[%c0, %c0_1] : memref<8x128xf32, #tpu.memory_space<vmem>>, vector<8x128xf32>
    %c0_2 = arith.constant 0 : index
    %c0_3 = arith.constant 0 : index
    %4 = vector.load %arg3[%c0_2, %c0_3] : memref<128x128xf32, #tpu.memory_space<vmem>>, vector<128x128xf32>
    %cst = arith.constant dense<0.000000e+00> : vector<8x128xf32>
    %5 = tpu.matmul %3, %4, %cst {dimension_numbers = #tpu.dot_dimension_numbers<[1], [0], [0], [1], [0, 0, 1, 1], [], []>} : vector<8x128xf32>, vector<128x128xf32>, vector<8x128xf32> -> vector<8x128xf32>
    %c0_4 = arith.constant 0 : index
    %c0_5 = arith.constant 0 : index
    %6 = vector.load %arg4[%c0_4, %c0_5] : memref<1x128xf32, #tpu.memory_space<vmem>>, vector<1x128xf32>
    %7 = vector.broadcast %6 : vector<1x128xf32> to vector<8x128xf32>
    %8 = arith.addf %5, %7 : vector<8x128xf32>
    %cst_6 = arith.constant 0.000000e+00 : f32
    %9 = vector.broadcast %cst_6 : f32 to vector<8x128xf32>
    %10 = arith.maximumf %8, %9 : vector<8x128xf32>
    %c0_7 = arith.constant 0 : index
    %c0_8 = arith.constant 0 : index
    %11 = vector.load %arg8[%c0_7, %c0_8] : memref<8x128xf32, #tpu.memory_space<vmem>>, vector<8x128xf32>
    tpu.vector_store %arg8[%c0_7, %c0_8], %10 {strides = array<i32>} : memref<8x128xf32, #tpu.memory_space<vmem>>, vector<8x128xf32>,
    %c0_9 = arith.constant 0 : index
    %c0_10 = arith.constant 0 : index
    %12 = vector.load %arg9[%c0_9, %c0_10] : memref<8x128xf32, #tpu.memory_space<vmem>>, vector<8x128xf32>
    %c0_11 = arith.constant 0 : index
    %c0_12 = arith.constant 0 : index
    %13 = vector.load %arg5[%c0_11, %c0_12] : memref<128x128xf32, #tpu.memory_space<vmem>>, vector<128x128xf32>
    %cst_13 = arith.constant dense<0.000000e+00> : vector<8x128xf32>
    %14 = tpu.matmul %10, %13, %cst_13 {dimension_numbers = #tpu.dot_dimension_numbers<[1], [0], [0], [1], [0, 0, 1, 1], [], []>} : vector<8x128xf32>, vector<128x128xf32>, vector<8x128xf32> -> vector<8x128xf32>
    %15 = arith.addf %12, %14 : vector<8x128xf32>
    %c0_14 = arith.constant 0 : index
    %c0_15 = arith.constant 0 : index
    %16 = vector.load %arg9[%c0_14, %c0_15] : memref<8x128xf32, #tpu.memory_space<vmem>>, vector<8x128xf32>
    tpu.vector_store %arg9[%c0_14, %c0_15], %15 {strides = array<i32>} : memref<8x128xf32, #tpu.memory_space<vmem>>, vector<8x128xf32>,
    %c1_i32 = arith.constant 1 : i32
    %17 = arith.cmpi eq, %arg1, %c1_i32 : i32
    %18 = arith.extui %17 : i1 to i32
    %c0_i32_16 = arith.constant 0 : i32
    %19 = arith.cmpi ne, %18, %c0_i32_16 : i32
    scf.if %19 {
      %c0_17 = arith.constant 0 : index
      %c0_18 = arith.constant 0 : index
      %20 = vector.load %arg9[%c0_17, %c0_18] : memref<8x128xf32, #tpu.memory_space<vmem>>, vector<8x128xf32>
      %c0_19 = arith.constant 0 : index
      %c0_20 = arith.constant 0 : index
      %21 = vector.load %arg6[%c0_19, %c0_20] : memref<1x128xf32, #tpu.memory_space<vmem>>, vector<1x128xf32>
      %22 = vector.broadcast %21 : vector<1x128xf32> to vector<8x128xf32>
      %23 = arith.addf %20, %22 : vector<8x128xf32>
      %c0_21 = arith.constant 0 : index
      %c0_22 = arith.constant 0 : index
      %24 = vector.load %arg7[%c0_21, %c0_22] : memref<8x128xf32, #tpu.memory_space<vmem>>, vector<8x128xf32>
      tpu.vector_store %arg7[%c0_21, %c0_22], %23 {strides = array<i32>} : memref<8x128xf32, #tpu.memory_space<vmem>>, vector<8x128xf32>,
    } else {
    }
    return
  }
  func.func @transform_0(%arg0: i32, %arg1: i32) -> (i32, i32) {
    %c0_i32 = arith.constant 0 : i32
    %c0_i32_0 = arith.constant 0 : i32
    return %arg0, %c0_i32 : i32, i32
  }
  func.func @transform_1(%arg0: i32, %arg1: i32) -> (i32, i32) {
    %c0_i32 = arith.constant 0 : i32
    %c0_i32_0 = arith.constant 0 : i32
    return %c0_i32, %arg1 : i32, i32
  }
  func.func @transform_2(%arg0: i32, %arg1: i32) -> (i32, i32) {
    %c0_i32 = arith.constant 0 : i32
    %c0_i32_0 = arith.constant 0 : i32
    return %c0_i32, %arg1 : i32, i32
  }
  func.func @transform_3(%arg0: i32, %arg1: i32) -> (i32, i32) {
    %c0_i32 = arith.constant 0 : i32
    %c0_i32_0 = arith.constant 0 : i32
    return %arg1, %c0_i32 : i32, i32
  }
  func.func @transform_4(%arg0: i32, %arg1: i32) -> (i32, i32) {
    %c0_i32 = arith.constant 0 : i32
    %c0_i32_0 = arith.constant 0 : i32
    %c0_i32_1 = arith.constant 0 : i32
    return %c0_i32, %c0_i32_0 : i32, i32
  }
  func.func @transform_5(%arg0: i32, %arg1: i32) -> (i32, i32) {
    %c0_i32 = arith.constant 0 : i32
    %c0_i32_0 = arith.constant 0 : i32
    return %arg0, %c0_i32 : i32, i32
  }
  func.func @transform_6(%arg0: i32, %arg1: i32) -> (i32, i32) {
    %c0_i32 = arith.constant 0 : i32
    return %arg0, %arg1 : i32, i32
  }
}

</mosaic_0001>

<llo_original>
// kernel: tpu_custom_call.1
$region0: #{tpu_custom_call.1}
  #allocation0 [shape = 'u32[]', space=smem, size = 0x4, offset = 0x4, fixed_abs, tag = 'smem constant byte address 0x4 - core index']
  #allocation1 [shape = 'u32[144,128]{1,0:T(1,128)}', space=vmem, size = 0x12000, scoped, tag = 'internal scratch']
  #allocation2 [shape = 'f32[8,128]{1,0:T(8,128)}', space=vmem, size = 0x1000, scoped, tag = 'scratch operand']
  %s0 = inlined_call_operand.hbm [shape: f32[16,128], index: 0, kind: input, shape index: {}]
  %s1 = inlined_call_operand.hbm [shape: f32[128,256], index: 1, kind: input, shape index: {}]
  %s2 = inlined_call_operand.vmem [shape: f32[1,256], index: 2, kind: input, shape index: {}]
  %s3 = inlined_call_operand.hbm [shape: f32[256,128], index: 3, kind: input, shape index: {}]
  %s4 = inlined_call_operand.vmem [shape: f32[1,128], index: 4, kind: input, shape index: {}]
  %s5 = inlined_call_operand.hbm [shape: f32[16,128], index: 5, kind: output, shape index: {0}]
  %s6 = inlined_call_operand.hbm [shape: f32[16,256], index: 6, kind: output, shape index: {1}]
  %7 = xla_tuple %s5, %s6
  %s8 = sld [smem:[#allocation0]]
  $region81: #{tpu_custom_call.1} parent=0
    _
  %s10 = ssub.s32 1, %s8
  %s11 = scalar_select 0, %s10, %s8
  $region1: #{tpu_custom_call.1} parent=0
    #allocation3 [shape = 'u8[8192]{0}', space=vmem, size = 0x2000, scoped, tag = 'input window, operand 0']
    #allocation4 [shape = 's32[2]{0}', space=sflag, size = 0x8, scoped, tag = 'scoped memory for tpu_custom_call.1']
    #allocation5 [shape = 's32[2]{0}', space=sflag, size = 0x8, scoped, tag = 'scoped memory for tpu_custom_call.1']
    #allocation6 [shape = 'u8[131072]{0}', space=vmem, size = 0x20000, scoped, tag = 'input window, operand 1']
    #allocation7 [shape = 's32[2]{0}', space=sflag, size = 0x8, scoped, tag = 'scoped memory for tpu_custom_call.1']
    #allocation8 [shape = 'u8[131072]{0}', space=vmem, size = 0x20000, scoped, tag = 'input window, operand 3']
    #allocation9 [shape = 'u8[8192]{0}', space=vmem, size = 0x2000, scoped, tag = 'output window, operand 0']
    #allocation10 [shape = 'u8[8192]{0}', space=vmem, size = 0x2000, scoped, tag = 'output window, operand 1']
    #allocation11 [shape = 's32[2]{0}', space=sflag, size = 0x8, scoped, tag = 'scoped memory for tpu_custom_call.1']
    %12 = vsyncpa [#allocation4], 0
    %s13 = scalar_lea.sflag [#allocation4], 1
    %14 = vsyncpa %s13, 0
    %15 = vsyncpa [#allocation7], 0
    %s16 = scalar_lea.sflag [#allocation7], 1
    %17 = vsyncpa %s16, 0
    %18 = vsyncpa [#allocation5], 0
    %s19 = scalar_lea.sflag [#allocation5], 1
    %20 = vsyncpa %s19, 0
    %21 = vsyncpa [#allocation11], 0
    %s22 = scalar_lea.sflag [#allocation11], 1
    %23 = vsyncpa %s22, 0
    loop: start=0, step=1, limit=6
    $region2: #{tpu_custom_call.1} parent=1 // loop_pre_header
      _
    $region3: #{tpu_custom_call.1} parent=1 // loop_header
      %s25 = sphi 0, %s29
      %p26 = scmp.ge.s32.totalorder %s25, 6
      %s32 = sphi 0, %s44
      %s33 = sphi 0, %s40
      %s34 = sphi 0, %s32
      %s35 = sphi 0, %s33
      %s36 = sphi 0, %s34
      %s37 = sphi 0, %s35
      %s47 = sphi 0, %s49
      %s50 = sphi 0, %s47
      %s51 = sphi 0, %s50
      %s67 = sphi 0, %s51
      %s73 = sphi 0, %s75
      %s76 = sphi 0, %s73
      %s77 = sphi 0, %s76
      %s93 = sphi 0, %s77
      %s99 = sphi 0, %s101
      %s102 = sphi 0, %s99
      %s103 = sphi 0, %s102
      %s119 = sphi 0, %s103
      %s125 = sphi 0, %s127
      %s128 = sphi 0, %s125
      %s129 = sphi 0, %s128
      %s145 = sphi 0, %s129
      %s149 = sphi 0, %s149
      %s151 = sphi 0, %s149
      %s152 = sphi 0, %s151
      %s166 = sphi 0, %s152
      %s172 = sphi 0, %s174
      %s175 = sphi 0, %s172
      %s176 = sphi 0, %s175
      %s192 = sphi 0, %s176
      %s200 = sphi 0, %s202
      %s203 = sphi 0, %s200
      %s204 = sphi 0, %s203
      %s220 = sphi 0, %s204
    $region4: #{tpu_custom_call.1} parent=1 // loop_header_branch
      %28 = sbr.rel (%p26) target = $region8
    $region5: #{tpu_custom_call.1} parent=1 // loop_body
      %s30 = ssub.s32 %s25, 1
      %s31 = ssub.s32 %s25, 2
      %s38 = sadd.s32 1, %s33
      %p39 = scmp.ge.s32.totalorder %s38, 2
      %s40 = scalar_select %p39, 0, %s38
      %s41 = sadd.s32 1, %s32
      %s42 = scalar_select %p39, %s41, %s32
      %p43 = scmp.ge.s32.totalorder %s42, 2
      %s44 = scalar_select %p43, 0, %s42
      %s45 = ssub.s32 %s32, %s44
      %p46 = scmp.eq.s32.totalorder %s45, 0
      %s48 = sadd.s32 %s47, 1
      %s49 = scalar_select %p46, %s47, %s48
      %p52 = pneg %p46
      %p53 = scmp.eq.s32.totalorder %s25, 3
      %p54 = por %p52, %p53
      %p55 = scmp.ne.s32.totalorder %s47, %s50
      %p56 = scmp.eq.s32.totalorder %s25, 0
      %p57 = por %p55, %p56
      %p58 = scmp.ne.s32.totalorder %s47, %s50
      %p59 = scmp.eq.s32.totalorder %s30, 3
      %p60 = por %p58, %p59
      %p61 = scmp.ne.s32.totalorder %s50, %s51
      %p62 = scmp.eq.s32.totalorder %s30, 0
      %p63 = por %p61, %p62
      %p64 = scmp.ne.s32.totalorder %s50, %s51
      %p65 = scmp.eq.s32.totalorder %s31, 3
      %p66 = por %p64, %p65
      %p68 = scmp.ne.s32.totalorder %s51, %s67
      %p69 = scmp.eq.s32.totalorder %s31, 0
      %p70 = por %p68, %p69
      %s71 = ssub.s32 %s33, %s40
      %p72 = scmp.eq.s32.totalorder %s71, 0
      %s74 = sadd.s32 %s73, 1
      %s75 = scalar_select %p72, %s73, %s74
      %p78 = pneg %p72
      %p79 = scmp.eq.s32.totalorder %s25, 3
      %p80 = por %p78, %p79
      %p81 = scmp.ne.s32.totalorder %s73, %s76
      %p82 = scmp.eq.s32.totalorder %s25, 0
      %p83 = por %p81, %p82
      %p84 = scmp.ne.s32.totalorder %s73, %s76
      %p85 = scmp.eq.s32.totalorder %s30, 3
      %p86 = por %p84, %p85
      %p87 = scmp.ne.s32.totalorder %s76, %s77
      %p88 = scmp.eq.s32.totalorder %s30, 0
      %p89 = por %p87, %p88
      %p90 = scmp.ne.s32.totalorder %s76, %s77
      %p91 = scmp.eq.s32.totalorder %s31, 3
      %p92 = por %p90, %p91
      %p94 = scmp.ne.s32.totalorder %s77, %s93
      %p95 = scmp.eq.s32.totalorder %s31, 0
      %p96 = por %p94, %p95
      %s97 = ssub.s32 %s33, %s40
      %p98 = scmp.eq.s32.totalorder %s97, 0
      %s100 = sadd.s32 %s99, 1
      %s101 = scalar_select %p98, %s99, %s100
      %p104 = pneg %p98
      %p105 = scmp.eq.s32.totalorder %s25, 3
      %p106 = por %p104, %p105
      %p107 = scmp.ne.s32.totalorder %s99, %s102
      %p108 = scmp.eq.s32.totalorder %s25, 0
      %p109 = por %p107, %p108
      %p110 = scmp.ne.s32.totalorder %s99, %s102
      %p111 = scmp.eq.s32.totalorder %s30, 3
      %p112 = por %p110, %p111
      %p113 = scmp.ne.s32.totalorder %s102, %s103
      %p114 = scmp.eq.s32.totalorder %s30, 0
      %p115 = por %p113, %p114
      %p116 = scmp.ne.s32.totalorder %s102, %s103
      %p117 = scmp.eq.s32.totalorder %s31, 3
      %p118 = por %p116, %p117
      %p120 = scmp.ne.s32.totalorder %s103, %s119
      %p121 = scmp.eq.s32.totalorder %s31, 0
      %p122 = por %p120, %p121
      %s123 = ssub.s32 %s33, %s40
      %p124 = scmp.eq.s32.totalorder %s123, 0
      %s126 = sadd.s32 %s125, 1
      %s127 = scalar_select %p124, %s125, %s126
      %p130 = pneg %p124
      %p131 = scmp.eq.s32.totalorder %s25, 3
      %p132 = por %p130, %p131
      %p133 = scmp.ne.s32.totalorder %s125, %s128
      %p134 = scmp.eq.s32.totalorder %s25, 0
      %p135 = por %p133, %p134
      %p136 = scmp.ne.s32.totalorder %s125, %s128
      %p137 = scmp.eq.s32.totalorder %s30, 3
      %p138 = por %p136, %p137
      %p139 = scmp.ne.s32.totalorder %s128, %s129
      %p140 = scmp.eq.s32.totalorder %s30, 0
      %p141 = por %p139, %p140
      %p142 = scmp.ne.s32.totalorder %s128, %s129
      %p143 = scmp.eq.s32.totalorder %s31, 3
      %p144 = por %p142, %p143
      %p146 = scmp.ne.s32.totalorder %s129, %s145
      %p147 = scmp.eq.s32.totalorder %s31, 0
      %p148 = por %p146, %p147
      %s150 = sadd.s32 %s149, 1
      %p153 = scmp.eq.s32.totalorder %s25, 3
      %p154 = scmp.ne.s32.totalorder %s149, %s151
      %p155 = scmp.eq.s32.totalorder %s25, 0
      %p156 = por %p154, %p155
      %p157 = scmp.ne.s32.totalorder %s149, %s151
      %p158 = scmp.eq.s32.totalorder %s30, 3
      %p159 = por %p157, %p158
      %p160 = scmp.ne.s32.totalorder %s151, %s152
      %p161 = scmp.eq.s32.totalorder %s30, 0
      %p162 = por %p160, %p161
      %p163 = scmp.ne.s32.totalorder %s151, %s152
      %p164 = scmp.eq.s32.totalorder %s31, 3
      %p165 = por %p163, %p164
      %p167 = scmp.ne.s32.totalorder %s152, %s166
      %p168 = scmp.eq.s32.totalorder %s31, 0
      %p169 = por %p167, %p168
      %s170 = ssub.s32 %s32, %s44
      %p171 = scmp.eq.s32.totalorder %s170, 0
      %s173 = sadd.s32 %s172, 1
      %s174 = scalar_select %p171, %s172, %s173
      %p177 = pneg %p171
      %p178 = scmp.eq.s32.totalorder %s25, 3
      %p179 = por %p177, %p178
      %p180 = scmp.ne.s32.totalorder %s172, %s175
      %p181 = scmp.eq.s32.totalorder %s25, 0
      %p182 = por %p180, %p181
      %p183 = scmp.ne.s32.totalorder %s172, %s175
      %p184 = scmp.eq.s32.totalorder %s30, 3
      %p185 = por %p183, %p184
      %p186 = scmp.ne.s32.totalorder %s175, %s176
      %p187 = scmp.eq.s32.totalorder %s30, 0
      %p188 = por %p186, %p187
      %p189 = scmp.ne.s32.totalorder %s175, %s176
      %p190 = scmp.eq.s32.totalorder %s31, 3
      %p191 = por %p189, %p190
      %p193 = scmp.ne.s32.totalorder %s176, %s192
      %p194 = scmp.eq.s32.totalorder %s31, 0
      %p195 = por %p193, %p194
      %s196 = ssub.s32 %s32, %s44
      %s197 = ssub.s32 %s33, %s40
      %s198 = sor.u32 %s196, %s197
      %p199 = scmp.eq.s32.totalorder %s198, 0
      %s201 = sadd.s32 %s200, 1
      %s202 = scalar_select %p199, %s200, %s201
      %p205 = pneg %p199
      %p206 = scmp.eq.s32.totalorder %s25, 3
      %p207 = por %p205, %p206
      %p208 = scmp.ne.s32.totalorder %s200, %s203
      %p209 = scmp.eq.s32.totalorder %s25, 0
      %p210 = por %p208, %p209
      %p211 = scmp.ne.s32.totalorder %s200, %s203
      %p212 = scmp.eq.s32.totalorder %s30, 3
      %p213 = por %p211, %p212
      %p214 = scmp.ne.s32.totalorder %s203, %s204
      %p215 = scmp.eq.s32.totalorder %s30, 0
      %p216 = por %p214, %p215
      %p217 = scmp.ne.s32.totalorder %s203, %s204
      %p218 = scmp.eq.s32.totalorder %s31, 3
      %p219 = por %p217, %p218
      %p221 = scmp.ne.s32.totalorder %s204, %s220
      %p222 = scmp.eq.s32.totalorder %s31, 0
      %p223 = por %p221, %p222
      %p224 = scmp.le.s32.totalorder 1, %s25
      %p225 = scmp.lt.s32.totalorder %s25, 5
      %p226 = pnand %p224, %p225
      %p227 = pneg %p226
      // Predicated region
      $region9: #{tpu_custom_call.1} parent=5 // pred_check
        _
      $region10: #{tpu_custom_call.1} parent=5 // pred_check_branch
        %229 = sbr.rel (%p226) target = $region12
      $region11: #{tpu_custom_call.1} parent=5 // pred_region
        %s230 = ssub.s32 %s25, 1
        // Predicated region
        $region13: #{tpu_custom_call.1} parent=11 // pred_check
          %p231 = pneg %p162
        $region14: #{tpu_custom_call.1} parent=11 // pred_check_branch
          %233 = sbr.rel (%p231) target = $region16
        $region15: #{tpu_custom_call.1} parent=11 // pred_region
          _
        $region16: #{tpu_custom_call.1} parent=11 // pred_fallthru
          _
      $region12: #{tpu_custom_call.1} parent=5 // pred_fallthru
        _
      %p234 = scmp.lt.s32.totalorder %s25, 4
      // Predicated region
      $region17: #{tpu_custom_call.1} parent=5 // pred_check
        %p235 = pneg %p234
      $region18: #{tpu_custom_call.1} parent=5 // pred_check_branch
        %237 = sbr.rel (%p235) target = $region20
      $region19: #{tpu_custom_call.1} parent=5 // pred_region
        // Predicated region
        $region21: #{tpu_custom_call.1} parent=19 // pred_check
          %p238 = pneg %p57
        $region22: #{tpu_custom_call.1} parent=19 // pred_check_branch
          %240 = sbr.rel (%p238) target = $region24
        $region23: #{tpu_custom_call.1} parent=19 // pred_region
          %s241 = sand.u32 %s47, 1
          %s242 = scalar_lea.sflag [#allocation4], %s241
          %s243 = sand.u32 %s47, 1
          %s244 = smul.addr %s243, 8
          %s245 = scalar_lea.vmem [#allocation3], %s244
          %s247 = ssub.s32 128, 128
          %248 = vsyncadd %s242, %s247
          %s249 = smul.addr %s32, 128
          %s250 = scalar_lea.hbm %s0, %s249
          %s252 = sshll.u32 %s245, 4
          %s253 = int_to_ptr.vmem [resolvable:$true] %s252
          %255 = dma.hbm_to_vmem [thread:$0]  %s250, 128, %s253, %s242
        $region24: #{tpu_custom_call.1} parent=19 // pred_fallthru
          _
        // Predicated region
        $region25: #{tpu_custom_call.1} parent=19 // pred_check
          %p256 = pneg %p83
        $region26: #{tpu_custom_call.1} parent=19 // pred_check_branch
          %258 = sbr.rel (%p256) target = $region28
        $region27: #{tpu_custom_call.1} parent=19 // pred_region
          %s259 = sand.u32 %s25, 1
          %s260 = scalar_lea.sflag [#allocation7], %s259
          %s261 = sand.u32 %s73, 1
          %s262 = smul.addr %s261, 128
          %s263 = scalar_lea.vmem [#allocation6], %s262
          %s265 = ssub.s32 2048, 2048
          %266 = vsyncadd %s260, %s265
          %s267 = smul.addr %s33, 128
          %s268 = scalar_lea.hbm %s1, %s267
          %s269 = sshll.u32 %s263, 4
          %s270 = int_to_ptr.vmem [resolvable:$true] %s269
          %275 = dma.hbm_to_vmem [thread:$0]  %s268, 2048, %s270, %s260, 256, 128, 8
        $region28: #{tpu_custom_call.1} parent=19 // pred_fallthru
          _
        // Predicated region
        $region29: #{tpu_custom_call.1} parent=19 // pred_check
          %p276 = pneg %p109
        $region30: #{tpu_custom_call.1} parent=19 // pred_check_branch
          %278 = sbr.rel (%p276) target = $region32
        $region31: #{tpu_custom_call.1} parent=19 // pred_region
          %p279 = scmp.lt.s32.totalorder %s33, 1
          %s280 = scalar_select %p279, %s33, 1
          %s281 = scalar_lea.vmem %s2, %s280
        $region32: #{tpu_custom_call.1} parent=19 // pred_fallthru
          _
        // Predicated region
        $region33: #{tpu_custom_call.1} parent=19 // pred_check
          %p282 = pneg %p135
        $region34: #{tpu_custom_call.1} parent=19 // pred_check_branch
          %284 = sbr.rel (%p282) target = $region36
        $region35: #{tpu_custom_call.1} parent=19 // pred_region
          %s285 = sand.u32 %s25, 1
          %s286 = scalar_lea.sflag [#allocation7], %s285
          %s287 = sand.u32 %s125, 1
          %s288 = smul.addr %s287, 128
          %s289 = scalar_lea.vmem [#allocation8], %s288
          %s290 = smul.u32 16, %s33
          %s292 = ssub.s32 2048, 2048
          %293 = vsyncadd %s286, %s292
          %s294 = smul.addr %s290, 128
          %s295 = scalar_lea.hbm %s3, %s294
          %s296 = sshll.u32 %s289, 4
          %s297 = int_to_ptr.vmem [resolvable:$true] %s296
          %302 = dma.hbm_to_vmem [thread:$0]  %s295, 2048, %s297, %s286, 128, 128, 8
        $region36: #{tpu_custom_call.1} parent=19 // pred_fallthru
          _
      $region20: #{tpu_custom_call.1} parent=5 // pred_fallthru
        _
      %p303 = scmp.le.s32.totalorder 1, %s25
      %p304 = scmp.lt.s32.totalorder %s25, 5
      %p305 = pnand %p303, %p304
      %p306 = pneg %p305
      // Predicated region
      $region37: #{tpu_custom_call.1} parent=5 // pred_check
        _
      $region38: #{tpu_custom_call.1} parent=5 // pred_check_branch
        %308 = sbr.rel (%p305) target = $region40
      $region39: #{tpu_custom_call.1} parent=5 // pred_region
        %s309 = ssub.s32 %s25, 1
        %s310 = sand.u32 %s50, 1
        %s311 = scalar_lea.sflag [#allocation4], %s310
        %s312 = sand.u32 %s50, 1
        %s313 = smul.addr %s312, 8
        %s314 = scalar_lea.vmem [#allocation3], %s313
        // Predicated region
        $region41: #{tpu_custom_call.1} parent=39 // pred_check
          %p315 = pneg %p63
        $region42: #{tpu_custom_call.1} parent=39 // pred_check_branch
          %317 = sbr.rel (%p315) target = $region44
        $region43: #{tpu_custom_call.1} parent=39 // pred_region
          %318 = dma.done %s311, 128
        $region44: #{tpu_custom_call.1} parent=39 // pred_fallthru
          _
        %s319 = sand.u32 %s30, 1
        %s320 = scalar_lea.sflag [#allocation7], %s319
        %s321 = sand.u32 %s76, 1
        %s322 = smul.addr %s321, 128
        %s323 = scalar_lea.vmem [#allocation6], %s322
        // Predicated region
        $region45: #{tpu_custom_call.1} parent=39 // pred_check
          %p324 = pneg %p89
        $region46: #{tpu_custom_call.1} parent=39 // pred_check_branch
          %326 = sbr.rel (%p324) target = $region48
        $region47: #{tpu_custom_call.1} parent=39 // pred_region
          %327 = dma.done %s320, 2048
        $region48: #{tpu_custom_call.1} parent=39 // pred_fallthru
          _
        %s328 = sand.u32 %s30, 1
        %s329 = scalar_lea.sflag [#allocation7], %s328
        %s330 = sand.u32 %s128, 1
        %s331 = smul.addr %s330, 128
        %s332 = scalar_lea.vmem [#allocation8], %s331
        // Predicated region
        $region49: #{tpu_custom_call.1} parent=39 // pred_check
          %p333 = pneg %p141
        $region50: #{tpu_custom_call.1} parent=39 // pred_check_branch
          %335 = sbr.rel (%p333) target = $region52
        $region51: #{tpu_custom_call.1} parent=39 // pred_region
          %336 = dma.done %s329, 2048
        $region52: #{tpu_custom_call.1} parent=39 // pred_fallthru
          _
        %s337 = sand.u32 %s50, 1
        %s338 = scalar_lea.sflag [#allocation4], %s337
        %s339 = sand.u32 %s50, 1
        %s340 = smul.addr %s339, 8
        %s341 = scalar_lea.vmem [#allocation3], %s340
        %p342 = pneg %p63
        %p343 = pneg %p60
        %s344 = sand.u32 %s30, 1
        %s345 = scalar_lea.sflag [#allocation7], %s344
        %s346 = sand.u32 %s76, 1
        %s347 = smul.addr %s346, 128
        %s348 = scalar_lea.vmem [#allocation6], %s347
        %p349 = pneg %p89
        %p350 = pneg %p86
        %p351 = scmp.lt.s32.totalorder %s35, 1
        %s352 = scalar_select %p351, %s35, 1
        %s353 = scalar_lea.vmem %s2, %s352
        %p354 = pneg %p115
        %p355 = pneg %p112
        %s356 = sand.u32 %s30, 1
        %s357 = scalar_lea.sflag [#allocation7], %s356
        %s358 = sand.u32 %s128, 1
        %s359 = smul.addr %s358, 128
        %s360 = scalar_lea.vmem [#allocation8], %s359
        %p361 = pneg %p141
        %p362 = pneg %p138
        %p363 = pneg %p162
        %p364 = pneg %p159
        %p365 = pneg %p188
        %p366 = pneg %p185
        %s367 = sand.u32 %s175, 1
        %s368 = scalar_lea.sflag [#allocation5], %s367
        %s369 = sand.u32 %s175, 1
        %s370 = smul.addr %s369, 8
        %s371 = scalar_lea.vmem [#allocation9], %s370
        %p372 = pneg %p216
        %p373 = pneg %p213
        %s374 = sand.u32 %s203, 1
        %s375 = scalar_lea.sflag [#allocation11], %s374
        %s376 = sand.u32 %s203, 1
        %s377 = smul.addr %s376, 8
        %s378 = scalar_lea.vmem [#allocation10], %s377
        %p379 = scmp.lt.s32.totalorder %s35, 1
        %s380 = scalar_select %p379, %s35, 1
        %s381 = scalar_lea.vmem %s2, %s380
        %s382 = smul.u32 16, %s35
        %p383 = scmp.eq.s32.totalorder %s35, 0
        // Predicated region
        $region53: #{tpu_custom_call.1} parent=39 // pred_check
          %p384 = pneg %p383
        $region54: #{tpu_custom_call.1} parent=39 // pred_check_branch
          %386 = sbr.rel (%p384) target = $region56
        $region55: #{tpu_custom_call.1} parent=39 // pred_region
          %387 = vst [vmem:[#allocation2] sm:$0xff] 0.0
        $region56: #{tpu_custom_call.1} parent=39 // pred_fallthru
          _
        %v388 = vld [vmem:[%s314] sm:$0xff]
        %v389 = vld [vmem:[%s323] sm:$0xff]
        %v390 = vld [vmem:[%s323 + $0x8] sm:$0xff]
        %v391 = vld [vmem:[%s323 + $0x10] sm:$0xff]
        %v392 = vld [vmem:[%s323 + $0x18] sm:$0xff]
        %v393 = vld [vmem:[%s323 + $0x20] sm:$0xff]
        %v394 = vld [vmem:[%s323 + $0x28] sm:$0xff]
        %v395 = vld [vmem:[%s323 + $0x30] sm:$0xff]
        %v396 = vld [vmem:[%s323 + $0x38] sm:$0xff]
        %v397 = vld [vmem:[%s323 + $0x40] sm:$0xff]
        %v398 = vld [vmem:[%s323 + $0x48] sm:$0xff]
        %v399 = vld [vmem:[%s323 + $0x50] sm:$0xff]
        %v400 = vld [vmem:[%s323 + $0x58] sm:$0xff]
        %v401 = vld [vmem:[%s323 + $0x60] sm:$0xff]
        %v402 = vld [vmem:[%s323 + $0x68] sm:$0xff]
        %v403 = vld [vmem:[%s323 + $0x70] sm:$0xff]
        %v404 = vld [vmem:[%s323 + $0x78] sm:$0xff]
        %v405 = vld [vmem:[%s381] sm:$0x1]
        %v407 = vlaneseq
        %v408 = vshrl.u32 %v407, 7
        %v409 = vsub.s32 0, %v408
        %v410 = vrot.slane %v405, %v409
        %412 = vmatprep.subr.mxu0 0.0
        %413 = vmatpush1.msra.mxu0 %v389
        %414 = vmatprep.subr.mxu0 0.0
        %415 = vmatpush1.msra.mxu0 %v390
        %416 = vmatprep.subr.mxu0 0.0
        %417 = vmatpush1.msra.mxu0 %v391
        %418 = vmatprep.subr.mxu0 0.0
        %419 = vmatpush1.msra.mxu0 %v392
        %420 = vmatprep.subr.mxu0 0.0
        %421 = vmatpush1.msra.mxu0 %v393
        %422 = vmatprep.subr.mxu0 0.0
        %423 = vmatpush1.msra.mxu0 %v394
        %424 = vmatprep.subr.mxu0 0.0
        %425 = vmatpush1.msra.mxu0 %v395
        %426 = vmatprep.subr.mxu0 0.0
        %427 = vmatpush1.msra.mxu0 %v396
        %428 = vmatprep.subr.mxu0 0.0
        %429 = vmatpush1.msra.mxu0 %v397
        %430 = vmatprep.subr.mxu0 0.0
        %431 = vmatpush1.msra.mxu0 %v398
        %432 = vmatprep.subr.mxu0 0.0
        %433 = vmatpush1.msra.mxu0 %v399
        %434 = vmatprep.subr.mxu0 0.0
        %435 = vmatpush1.msra.mxu0 %v400
        %436 = vmatprep.subr.mxu0 0.0
        %437 = vmatpush1.msra.mxu0 %v401
        %438 = vmatprep.subr.mxu0 0.0
        %439 = vmatpush1.msra.mxu0 %v402
        %440 = vmatprep.subr.mxu0 0.0
        %441 = vmatpush1.msra.mxu0 %v403
        %442 = vmatprep.subr.mxu0 0.0
        %443 = vmatpush1.msra.mxu0 %v404
        %444 = vmatprep.subr.mxu0 0.0
        %445 = vmatpush1.msra.mxu0 0.0
        %446 = vmatprep.subr.mxu0 0.0
        %447 = vmatpush1.msra.mxu0 0.0
        %448 = vmatprep.subr.mxu0 0.0
        %449 = vmatpush1.msra.mxu0 0.0
        %450 = vmatprep.subr.mxu0 0.0
        %451 = vmatpush1.msra.mxu0 0.0
        %452 = vmatprep.subr.mxu0 0.0
        %453 = vmatpush1.msra.mxu0 0.0
        %454 = vmatprep.subr.mxu0 0.0
        %455 = vmatpush1.msra.mxu0 0.0
        %456 = vmatprep.subr.mxu0 0.0
        %457 = vmatpush1.msra.mxu0 0.0
        %458 = vmatprep.subr.mxu0 0.0
        %459 = vmatpush1.msra.mxu0 0.0
        %460 = vmatprep.subr.mxu0 0.0
        %461 = vmatpush1.msra.mxu0 0.0
        %462 = vmatprep.subr.mxu0 0.0
        %463 = vmatpush1.msra.mxu0 0.0
        %464 = vmatprep.subr.mxu0 0.0
        %465 = vmatpush1.msra.mxu0 0.0
        %466 = vmatprep.subr.mxu0 0.0
        %467 = vmatpush1.msra.mxu0 0.0
        %468 = vmatprep.subr.mxu0 0.0
        %469 = vmatpush1.msra.mxu0 0.0
        %470 = vmatprep.subr.mxu0 0.0
        %471 = vmatpush1.msra.mxu0 0.0
        %472 = vmatprep.subr.mxu0 0.0
        %473 = vmatpush1.msra.mxu0 0.0
        %474 = vmatprep.subr.mxu0 0.0
        %475 = vmatpush1.msra.mxu0 0.0
        %476 = vmatprep.mubr.f32.mxu0 0.0
        %477 = vmatmul.mubr.f32.gmra.mrb[0].mxu0 %v388
        %v478 = vpop.f32.mrb[0].mxu0
        %v479 = vadd.f32 %v410, %v478
        %v480 = vpop.f32.mrb[0].mxu0
        %481 = vdwg.mxu0
        %v482 = vmax.f32 %v479, 0.0
        %483 = vst [vmem:[%s378] sm:$0xff] %v482
        %v484 = vld [vmem:[#allocation2] sm:$0xff]
        %v485 = vld [vmem:[%s332] sm:$0xff]
        %v486 = vld [vmem:[%s332 + $0x8] sm:$0xff]
        %v487 = vld [vmem:[%s332 + $0x10] sm:$0xff]
        %v488 = vld [vmem:[%s332 + $0x18] sm:$0xff]
        %v489 = vld [vmem:[%s332 + $0x20] sm:$0xff]
        %v490 = vld [vmem:[%s332 + $0x28] sm:$0xff]
        %v491 = vld [vmem:[%s332 + $0x30] sm:$0xff]
        %v492 = vld [vmem:[%s332 + $0x38] sm:$0xff]
        %v493 = vld [vmem:[%s332 + $0x40] sm:$0xff]
        %v494 = vld [vmem:[%s332 + $0x48] sm:$0xff]
        %v495 = vld [vmem:[%s332 + $0x50] sm:$0xff]
        %v496 = vld [vmem:[%s332 + $0x58] sm:$0xff]
        %v497 = vld [vmem:[%s332 + $0x60] sm:$0xff]
        %v498 = vld [vmem:[%s332 + $0x68] sm:$0xff]
        %v499 = vld [vmem:[%s332 + $0x70] sm:$0xff]
        %v500 = vld [vmem:[%s332 + $0x78] sm:$0xff]
        %501 = vmatprep.subr.mxu0 0.0
        %502 = vmatpush1.msra.mxu0 %v485
        %503 = vmatprep.subr.mxu0 0.0
        %504 = vmatpush1.msra.mxu0 %v486
        %505 = vmatprep.subr.mxu0 0.0
        %506 = vmatpush1.msra.mxu0 %v487
        %507 = vmatprep.subr.mxu0 0.0
        %508 = vmatpush1.msra.mxu0 %v488
        %509 = vmatprep.subr.mxu0 0.0
        %510 = vmatpush1.msra.mxu0 %v489
        %511 = vmatprep.subr.mxu0 0.0
        %512 = vmatpush1.msra.mxu0 %v490
        %513 = vmatprep.subr.mxu0 0.0
        %514 = vmatpush1.msra.mxu0 %v491
        %515 = vmatprep.subr.mxu0 0.0
        %516 = vmatpush1.msra.mxu0 %v492
        %517 = vmatprep.subr.mxu0 0.0
        %518 = vmatpush1.msra.mxu0 %v493
        %519 = vmatprep.subr.mxu0 0.0
        %520 = vmatpush1.msra.mxu0 %v494
        %521 = vmatprep.subr.mxu0 0.0
        %522 = vmatpush1.msra.mxu0 %v495
        %523 = vmatprep.subr.mxu0 0.0
        %524 = vmatpush1.msra.mxu0 %v496
        %525 = vmatprep.subr.mxu0 0.0
        %526 = vmatpush1.msra.mxu0 %v497
        %527 = vmatprep.subr.mxu0 0.0
        %528 = vmatpush1.msra.mxu0 %v498
        %529 = vmatprep.subr.mxu0 0.0
        %530 = vmatpush1.msra.mxu0 %v499
        %531 = vmatprep.subr.mxu0 0.0
        %532 = vmatpush1.msra.mxu0 %v500
        %533 = vmatprep.subr.mxu0 0.0
        %534 = vmatpush1.msra.mxu0 0.0
        %535 = vmatprep.subr.mxu0 0.0
        %536 = vmatpush1.msra.mxu0 0.0
        %537 = vmatprep.subr.mxu0 0.0
        %538 = vmatpush1.msra.mxu0 0.0
        %539 = vmatprep.subr.mxu0 0.0
        %540 = vmatpush1.msra.mxu0 0.0
        %541 = vmatprep.subr.mxu0 0.0
        %542 = vmatpush1.msra.mxu0 0.0
        %543 = vmatprep.subr.mxu0 0.0
        %544 = vmatpush1.msra.mxu0 0.0
        %545 = vmatprep.subr.mxu0 0.0
        %546 = vmatpush1.msra.mxu0 0.0
        %547 = vmatprep.subr.mxu0 0.0
        %548 = vmatpush1.msra.mxu0 0.0
        %549 = vmatprep.subr.mxu0 0.0
        %550 = vmatpush1.msra.mxu0 0.0
        %551 = vmatprep.subr.mxu0 0.0
        %552 = vmatpush1.msra.mxu0 0.0
        %553 = vmatprep.subr.mxu0 0.0
        %554 = vmatpush1.msra.mxu0 0.0
        %555 = vmatprep.subr.mxu0 0.0
        %556 = vmatpush1.msra.mxu0 0.0
        %557 = vmatprep.subr.mxu0 0.0
        %558 = vmatpush1.msra.mxu0 0.0
        %559 = vmatprep.subr.mxu0 0.0
        %560 = vmatpush1.msra.mxu0 0.0
        %561 = vmatprep.subr.mxu0 0.0
        %562 = vmatpush1.msra.mxu0 0.0
        %563 = vmatprep.subr.mxu0 0.0
        %564 = vmatpush1.msra.mxu0 0.0
        %565 = vmatprep.mubr.f32.mxu0 0.0
        %566 = vmatmul.mubr.f32.gmra.mrb[0].mxu0 %v482
        %v567 = vpop.f32.mrb[0].mxu0
        %v568 = vadd.f32 0.0, %v567
        %v569 = vpop.f32.mrb[0].mxu0
        %570 = vdwg.mxu0
        %v571 = vadd.f32 %v484, %v568
        %572 = vst [vmem:[#allocation2] sm:$0xff] %v571
        %p573 = scmp.eq.s32.totalorder %s35, 1
        // Predicated region
        $region57: #{tpu_custom_call.1} parent=39 // pred_check
          %p574 = pneg %p573
        $region58: #{tpu_custom_call.1} parent=39 // pred_check_branch
          %576 = sbr.rel (%p574) target = $region60
        $region59: #{tpu_custom_call.1} parent=39 // pred_region
          %v577 = vld [vmem:[#allocation2] sm:$0xff]
          %v578 = vld [vmem:[%s4] sm:$0x1]
          %v580 = vlaneseq
          %v581 = vshrl.u32 %v580, 7
          %v582 = vsub.s32 0, %v581
          %v583 = vrot.slane %v578, %v582
          %v585 = vadd.f32 %v577, %v583
          %586 = vst [vmem:[%s371] sm:$0xff] %v585
        $region60: #{tpu_custom_call.1} parent=39 // pred_fallthru
          _
        %s587 = sand.u32 %s175, 1
        %s588 = scalar_lea.sflag [#allocation5], %s587
        %s589 = sand.u32 %s175, 1
        %s590 = smul.addr %s589, 8
        %s591 = scalar_lea.vmem [#allocation9], %s590
        %s592 = sand.u32 %s203, 1
        %s593 = scalar_lea.sflag [#allocation11], %s592
        %s594 = sand.u32 %s203, 1
        %s595 = smul.addr %s594, 8
        %s596 = scalar_lea.vmem [#allocation10], %s595
        // Predicated region
        $region61: #{tpu_custom_call.1} parent=39 // pred_check
          %p597 = pneg %p185
        $region62: #{tpu_custom_call.1} parent=39 // pred_check_branch
          %599 = sbr.rel (%p597) target = $region64
        $region63: #{tpu_custom_call.1} parent=39 // pred_region
          %s601 = ssub.s32 128, 128
          %602 = vsyncadd %s588, %s601
          %s603 = smul.addr %s34, 128
          %s604 = scalar_lea.hbm %s5, %s603
          %s606 = sshll.u32 %s591, 4
          %s607 = int_to_ptr.vmem [resolvable:$true] %s606
          %609 = dma.vmem_to_hbm [thread:$0]  %s607, 128, %s604, %s588
        $region64: #{tpu_custom_call.1} parent=39 // pred_fallthru
          _
        // Predicated region
        $region65: #{tpu_custom_call.1} parent=39 // pred_check
          %p610 = pneg %p213
        $region66: #{tpu_custom_call.1} parent=39 // pred_check_branch
          %612 = sbr.rel (%p610) target = $region68
        $region67: #{tpu_custom_call.1} parent=39 // pred_region
          %s614 = ssub.s32 128, 128
          %615 = vsyncadd %s593, %s614
          %s616 = smul.addr %s34, 2
          %s617 = sadd.s32 %s35, %s616
          %s618 = smul.addr %s617, 128
          %s619 = scalar_lea.hbm %s6, %s618
          %s621 = sshll.u32 %s596, 4
          %s622 = int_to_ptr.vmem [resolvable:$true] %s621
          %624 = dma.vmem_to_hbm [thread:$0]  %s622, 128, %s619, %s593
        $region68: #{tpu_custom_call.1} parent=39 // pred_fallthru
          _
      $region40: #{tpu_custom_call.1} parent=5 // pred_fallthru
        _
      %p625 = scmp.le.s32.totalorder 2, %s25
      // Predicated region
      $region69: #{tpu_custom_call.1} parent=5 // pred_check
        %p626 = pneg %p625
      $region70: #{tpu_custom_call.1} parent=5 // pred_check_branch
        %628 = sbr.rel (%p626) target = $region72
      $region71: #{tpu_custom_call.1} parent=5 // pred_region
        %s629 = ssub.s32 %s25, 2
        // Predicated region
        $region73: #{tpu_custom_call.1} parent=71 // pred_check
          %p630 = pneg %p191
        $region74: #{tpu_custom_call.1} parent=71 // pred_check_branch
          %632 = sbr.rel (%p630) target = $region76
        $region75: #{tpu_custom_call.1} parent=71 // pred_region
          %s633 = sand.u32 %s176, 1
          %s634 = scalar_lea.sflag [#allocation5], %s633
          %s635 = sand.u32 %s176, 1
          %s636 = smul.addr %s635, 8
          %s637 = scalar_lea.vmem [#allocation9], %s636
          %638 = dma.done %s634, 128
        $region76: #{tpu_custom_call.1} parent=71 // pred_fallthru
          _
        // Predicated region
        $region77: #{tpu_custom_call.1} parent=71 // pred_check
          %p639 = pneg %p219
        $region78: #{tpu_custom_call.1} parent=71 // pred_check_branch
          %641 = sbr.rel (%p639) target = $region80
        $region79: #{tpu_custom_call.1} parent=71 // pred_region
          %s642 = sand.u32 %s204, 1
          %s643 = scalar_lea.sflag [#allocation11], %s642
          %s644 = sand.u32 %s204, 1
          %s645 = smul.addr %s644, 8
          %s646 = scalar_lea.vmem [#allocation10], %s645
          %647 = dma.done %s643, 128
        $region80: #{tpu_custom_call.1} parent=71 // pred_fallthru
          _
      $region72: #{tpu_custom_call.1} parent=5 // pred_fallthru
        _
    $region6: #{tpu_custom_call.1} parent=1 // loop_footer
      %s29 = sadd.s32 1, %s25
    $region7: #{tpu_custom_call.1} parent=1 // loop_footer_branch
      %24 = sbr.rel target = $region3
    $region8: #{tpu_custom_call.1} parent=1 // loop_exit
      _
    %648 = vsyncpa [#allocation4], 1
    %s649 = scalar_lea.sflag [#allocation4], 1
    %650 = vsyncpa %s649, 1
    %651 = vsyncpa [#allocation7], 1
    %s652 = scalar_lea.sflag [#allocation7], 1
    %653 = vsyncpa %s652, 1
    %654 = vsyncpa [#allocation5], 1
    %s655 = scalar_lea.sflag [#allocation5], 1
    %656 = vsyncpa %s655, 1
    %657 = vsyncpa [#allocation11], 1
    %s658 = scalar_lea.sflag [#allocation11], 1
    %659 = vsyncpa %s658, 1

</llo_original>
